<compile_context>
chip_gen: v6e
topology: v6e:2x2x1
jax: 0.10.0
libtpu: 0.0.40
codegen_flags: <defaults>
</compile_context>

<pallas_src>
import jax
import jax.numpy as jnp
from jax import lax
from jax.experimental import pallas as pl
from jax.experimental.pallas import tpu as pltpu

_LANE = 128


def _round_up(v, m):
    return (v + m - 1) // m * m


def _keep_mask(seed_u32, rows_u32, shape):
    """P(keep)=0.5 dropout mask from a counter-based integer hash.

    Pure jnp/lax integer ops (iota, xor, shift, mul) so it lowers both through
    Mosaic (VPU) and on the interpret/CPU path; the TPU-only pltpu.prng_*
    primitives have no CPU lowering.  `rows_u32` may be a scalar or an array
    broadcastable to `shape` (true per-image batch index).
    """
    col = lax.broadcasted_iota(jnp.int32, shape, len(shape) - 1).astype(jnp.uint32)
    h = col ^ (seed_u32 * jnp.uint32(0x9E3779B1) + rows_u32 * jnp.uint32(0x85EBCA77))
    # Wang/murmur-style finalizer rounds to decorrelate adjacent counters.
    h = (h ^ (h >> 16)) * jnp.uint32(0x7FEB352D)
    h = (h ^ (h >> 15)) * jnp.uint32(0x846CA68B)
    h = h ^ (h >> 16)
    # Low-bit test: exactly P = 0.5, avoids unsigned '<' corner cases.
    return (h & jnp.uint32(1)) == jnp.uint32(0)


def _encoder_kernel(seed_ref, x_ref, wct_ref, wf_ref, bf_ref, out_ref, acc_ref):
    # Grid: (batch block bb [parallel],  spatial tile k [arbitrary / reduction]).
    #   seed_ref: (1,)                   int32  SMEM (scalar prefetch)
    #   x_ref   : (b_tile, C, tile_hw)   f32    batch block, one spatial tile (NCHW-native)
    #   wct_ref : (hidden, C)            bf16   conv weight, pre-transposed in wrapper
    #   wf_ref  : (hidden, e_pad)        bf16   fc weight, pre-scaled by 1/HW, lane-padded
    #   bf_ref  : (1, e_pad)             f32    fc bias, lane-padded
    #   out_ref : (b_tile, e_pad)        f32    one dense output row per image
    #   acc_ref : (b_tile, hidden)       f32    pooled-sum accumulator across k
    #
    # COMPILE FIX: program_id / num_programs are only legal at the top level of
    # the kernel body on the interpret/CPU lowering path — never call them
    # inside a pl.when body (it becomes a cond branch jaxpr).
    bb = pl.program_id(0)
    k = pl.program_id(1)
    nk = pl.num_programs(1)

    b_tile = out_ref.shape[0]
    row_base = bb * b_tile                      # first global batch index of this block

    @pl.when(k == 0)
    def _init():
        acc_ref[...] = jnp.zeros_like(acc_ref)

    wct = wct_ref[...]                                         # (hidden, C) bf16
    tile_hw = x_ref.shape[2]
    ones_row = jnp.ones((1, tile_hw), jnp.float32)

    # Backbone 1x1 conv + ReLU + partial global-average-pool (as a sum; the
    # 1/HW scale is folded into wf).  Static unroll over the (<=8) images in
    # the block: each image is a clean 2-D MXU matmul in the lane-dense
    # [C, tile_hw] layout, and the ones-row contraction drops the result
    # directly into (1, hidden) row layout — no in-kernel transpose.
    # NOTE: with the synthetic C=4 backbone the x tile fills only 4 of 8
    # sublanes per vreg; a realistic backbone (C >= 512) would instead K-tile
    # over C and keep the MXU contraction depth full.
    partials = []
    for b in range(b_tile):
        xb = x_ref[b].astype(jnp.bfloat16)                     # (C, tile_hw), in-kernel cast
        h = jnp.dot(wct, xb, preferred_element_type=jnp.float32)   # (hidden, tile_hw) f32
        h = jnp.maximum(h, 0.0)                                # backbone ReLU
        partials.append(
            lax.dot_general(ones_row, h,
                            dimension_numbers=(((1,), (1,)), ((), ())),
                            preferred_element_type=jnp.float32))   # (1, hidden)
    acc_ref[...] += jnp.concatenate(partials, axis=0)          # (b_tile, hidden)

    @pl.when(k == nk - 1)
    def _finalize():
        # bf16 cast of the pooled activations (documented precision loss vs an
        # all-f32 PyTorch forward; reference applies the identical cast).
        pooled = acc_ref[...].astype(jnp.bfloat16)             # (b_tile, hidden)
        feat = jnp.dot(pooled, wf_ref[...],
                       preferred_element_type=jnp.float32) + bf_ref[...]
        feat = jnp.maximum(feat, 0.0)                          # EncoderCNN ReLU
        # EncoderCNN Dropout(p=0.5), training-mode semantics: zero + 2x scaling.
        seed = seed_ref[0].astype(jnp.uint32)
        rows = (row_base
                + lax.broadcasted_iota(jnp.int32, feat.shape, 0)).astype(jnp.uint32)
        keep = _keep_mask(seed, rows, feat.shape)
        out_ref[...] = jnp.where(keep, feat * 2.0, 0.0).astype(out_ref.dtype)

    # TODO(synk): the named_parameters() loop in forward() only toggles
    # (mis-spelled) require_grad flags; it has no numerical effect and is not
    # representable in a kernel.
    # TODO(synk): dropout is hard-wired to training mode (no eval passthrough).


def _pick_tile_hw(hw, c, b_tile, max_tile_hw, x_budget_bytes=24 * 1024 * 1024):
    """Largest lane-aligned spatial tile that divides HW and keeps the
    double-buffered f32 x block within a v7x-safe VMEM budget."""
    if hw % _LANE != 0:
        return hw                                   # single full-extent block
    by_budget = x_budget_bytes // (2 * b_tile * c * 4)   # 2 buffers, f32
    t = min(hw, max_tile_hw, max(_LANE, (by_budget // _LANE) * _LANE))
    t = max(_LANE, (t // _LANE) * _LANE)
    while hw % t:
        t -= _LANE
    return t


def encoder_cnn_forward(x_nchw, w_conv, w_fc, b_fc, seed=0, *, max_tile_hw=16384):
    B, C, H, W = x_nchw.shape
    HW = H * W
    hidden = w_conv.shape[1]
    embed = w_fc.shape[1]
    assert w_conv.shape[0] == C and w_fc.shape[0] == hidden

    # Batch block: 8 images fills the MXU M dim / output sublanes; for tiny
    # batches use the whole batch in one block (block dim == array dim keeps
    # the BlockSpec legal).  With B >= 16 the batch grid extent is >= 2 so both
    # v7x TensorCores get work under dimension_semantics=("parallel", ...).
    if B >= 8:
        b_tile = 8
        b_pad = _round_up(B, b_tile)
    else:
        b_tile = B
        b_pad = B

    # Lane-dense NCHW-native activation layout: [B, C, H*W] is a free reshape.
    # x stays f32 in HBM — the bf16 cast happens per tile inside the kernel, so
    # the activation is read from HBM exactly once (no extra wrapper cast pass).
    x = x_nchw.reshape(B, C, HW)
    if b_pad != B:
        x = jnp.pad(x, ((0, b_pad - B), (0, 0), (0, 0)))

    # Tiny parameter prep (exact linear-algebra identities, done once):
    #   * transpose w_conv so the conv matmul is a standard [M,K]@[K,N],
    #   * fold the 1/HW global-average-pool scale into w_fc,
    #   * pad the fc output dim to a multiple of 128 for lane-dense stores.
    e_pad = _round_up(embed, _LANE)
    wct = jnp.transpose(w_conv).astype(jnp.bfloat16)                       # (hidden, C)
    wf = jnp.pad(w_fc / float(HW), ((0, 0), (0, e_pad - embed))).astype(jnp.bfloat16)
    bf = jnp.pad(b_fc.reshape(1, embed).astype(jnp.float32),
                 ((0, 0), (0, e_pad - embed)))

    tile_hw = _pick_tile_hw(HW, C, b_tile, max_tile_hw)
    num_k = HW // tile_hw

    seed_arr = jnp.asarray([seed], dtype=jnp.int32)

    out = pl.pallas_call(
        _encoder_kernel,
        out_shape=jax.ShapeDtypeStruct((b_pad, e_pad), jnp.float32),
        grid_spec=pltpu.PrefetchScalarGridSpec(
            num_scalar_prefetch=1,                       # seed -> SMEM
            grid=(b_pad // b_tile, num_k),
            in_specs=[
                pl.BlockSpec((b_tile, C, tile_hw), lambda bb, k, s: (bb, 0, k)),  # x tiles (f32)
                pl.BlockSpec((hidden, C), lambda bb, k, s: (0, 0)),               # conv weight^T
                pl.BlockSpec((hidden, e_pad), lambda bb, k, s: (0, 0)),           # fc weight (scaled)
                pl.BlockSpec((1, e_pad), lambda bb, k, s: (0, 0)),                # fc bias
            ],
            out_specs=pl.BlockSpec((b_tile, e_pad), lambda bb, k, s: (bb, 0)),
            scratch_shapes=[pltpu.VMEM((b_tile, hidden), jnp.float32)],
        ),
        compiler_params=pltpu.CompilerParams(
            # batch axis splits across v7x's 2 TensorCores; spatial axis is a reduction.
            dimension_semantics=("parallel", "arbitrary"),
            # 48 MiB is safe on v7x (64 MiB VMEM) and ample for these blocks;
            # raise toward ~100 MiB on v5e/v6e if tiles are enlarged further.
            vmem_limit_bytes=48 * 1024 * 1024,
        ),
    )(seed_arr, x, wct, wf, bf)

    return out[:B, :embed]                             # drop batch/lane padding


def _reference(x_nchw, w_conv, w_fc, b_fc, seed):
    """Pure-jnp replica of the kernel math (same bf16 casts, same dropout hash)."""
    B, C, H, W = x_nchw.shape
    HW = H * W
    embed = w_fc.shape[1]
    xf = x_nchw.reshape(B, C, HW)
    wct = jnp.transpose(w_conv).astype(jnp.bfloat16).astype(jnp.float32)
    wf = (w_fc / float(HW)).astype(jnp.bfloat16).astype(jnp.float32)
    bf = b_fc.reshape(1, embed).astype(jnp.float32)
    rows = []
    for b in range(B):
        xb = xf[b].astype(jnp.bfloat16).astype(jnp.float32)               # in-kernel cast
        h = jnp.maximum(wct @ xb, 0.0)                                    # (hidden, HW)
        pooled = jnp.sum(h, axis=1)[None, :].astype(jnp.bfloat16).astype(jnp.float32)
        feat = jnp.maximum(pooled @ wf + bf, 0.0)                         # (1, embed)
        keep = _keep_mask(jnp.uint32(seed), jnp.uint32(b), feat.shape)
        rows.append(jnp.where(keep, feat * 2.0, 0.0))
    return jnp.concatenate(rows, axis=0)


if __name__ == "__main__":
    key = jax.random.PRNGKey(0)
    kx, kc, kf, kb = jax.random.split(key, 4)

    # Small shapes consistent with the module's forward.  hidden is a multiple
    # of 256 so the conv matmul fills the v6e/v7x MXU M rows.
    B, C, H, W = 2, 4, 16, 16
    hidden, embed = 256, 128

    x = jax.random.normal(kx, (B, C, H, W), dtype=jnp.float32)
    # Deterministic synthetic parameters (no checkpoint loading).
    w_conv = 0.1 * jax.random.normal(kc, (C, hidden), dtype=jnp.float32)
    w_fc = 0.1 * jax.random.normal(kf, (hidden, embed), dtype=jnp.float32)
    b_fc = 0.1 * jax.random.normal(kb, (1, embed), dtype=jnp.float32)

    out = jax.block_until_ready(encoder_cnn_forward(x, w_conv, w_fc, b_fc, seed=0))
    assert out.shape == (B, embed), out.shape
    assert bool(jnp.all(out >= 0.0))          # ReLU + dropout keeps outputs non-negative

    ref = _reference(x, w_conv, w_fc, b_fc, seed=0)
    assert bool(jnp.allclose(out, ref, rtol=2e-2, atol=2e-3)), "kernel != reference"

    # Exercise the multi-tile spatial reduction path (num_k > 1, accumulator
    # init/finalize across k) — previously untested.
    out_mk = jax.block_until_ready(
        encoder_cnn_forward(x, w_conv, w_fc, b_fc, seed=0, max_tile_hw=128))
    assert bool(jnp.allclose(out_mk, ref, rtol=2e-2, atol=2e-3)), "multi-tile != reference"

    print("KERNEL_OK")
</pallas_src>

<mosaic_0001>
module attributes {stable_mosaic.version = 11 : i64} {
  func.func @_encoder_kernel(%arg0: i32, %arg1: i32, %arg2: memref<1xi32, #tpu.memory_space<smem>>, %arg3: memref<2x4x256xf32, #tpu.memory_space<vmem>>, %arg4: memref<256x4xbf16, #tpu.memory_space<vmem>>, %arg5: memref<256x128xbf16, #tpu.memory_space<vmem>>, %arg6: memref<1x128xf32, #tpu.memory_space<vmem>>, %arg7: memref<2x128xf32, #tpu.memory_space<vmem>>, %arg8: memref<2x256xf32, #tpu.memory_space<vmem>>) attributes {dimension_semantics = [#tpu.dimension_semantics<parallel>, #tpu.dimension_semantics<arbitrary>], iteration_bounds = array<i64: 1, 1>, scalar_prefetch = 1 : i64, scratch_operands = 1 : i64, tpu.core_type = #tpu.core_type<tc>, window_params = [{transform_indices = @transform_0, window_bounds = array<i64: 2, 4, 256>}, {pipeline_mode = #tpu.pipeline_mode<synchronous>, transform_indices = @transform_1, window_bounds = array<i64: 256, 4>}, {pipeline_mode = #tpu.pipeline_mode<synchronous>, transform_indices = @transform_2, window_bounds = array<i64: 256, 128>}, {pipeline_mode = #tpu.pipeline_mode<synchronous>, transform_indices = @transform_3, window_bounds = array<i64: 1, 128>}, {transform_indices = @transform_4, window_bounds = array<i64: 2, 128>}]} {
    %c2_i32 = arith.constant 2 : i32
    %0 = arith.muli %arg0, %c2_i32 : i32
    %c0_i32 = arith.constant 0 : i32
    %1 = arith.cmpi eq, %arg1, %c0_i32 : i32
    %2 = arith.extui %1 : i1 to i32
    %c0_i32_0 = arith.constant 0 : i32
    %3 = arith.cmpi ne, %2, %c0_i32_0 : i32
    scf.if %3 {
      %cst_19 = arith.constant 0.000000e+00 : f32
      %27 = vector.broadcast %cst_19 : f32 to vector<2x256xf32>
      %c0_20 = arith.constant 0 : index
      %c0_21 = arith.constant 0 : index
      %28 = vector.load %arg8[%c0_20, %c0_21] : memref<2x256xf32, #tpu.memory_space<vmem>>, vector<2x256xf32>
      tpu.vector_store %arg8[%c0_20, %c0_21], %27 {strides = array<i32>} : memref<2x256xf32, #tpu.memory_space<vmem>>, vector<2x256xf32>,
    } else {
    }
    %c0 = arith.constant 0 : index
    %c0_1 = arith.constant 0 : index
    %4 = vector.load %arg4[%c0, %c0_1] : memref<256x4xbf16, #tpu.memory_space<vmem>>, vector<256x4xbf16>
    %cst = arith.constant 1.000000e+00 : f32
    %5 = vector.broadcast %cst : f32 to vector<1x256xf32>
    %c0_2 = arith.constant 0 : index
    %c0_3 = arith.constant 0 : index
    %c0_4 = arith.constant 0 : index
    %6 = vector.load %arg3[%c0_2, %c0_3, %c0_4] : memref<2x4x256xf32, #tpu.memory_space<vmem>>, vector<1x4x256xf32>
    %7 = vector.shape_cast %6 : vector<1x4x256xf32> to vector<4x256xf32>
    %8 = arith.truncf %7 : vector<4x256xf32> to vector<4x256xbf16>
    %cst_5 = arith.constant dense<0.000000e+00> : vector<256x256xf32>
    %9 = tpu.matmul %4, %8, %cst_5 {dimension_numbers = #tpu.dot_dimension_numbers<[1], [0], [0], [1], [0, 0, 1, 1], [], []>} : vector<256x4xbf16>, vector<4x256xbf16>, vector<256x256xf32> -> vector<256x256xf32>
    %cst_6 = arith.constant 0.000000e+00 : f32
    %10 = vector.broadcast %cst_6 : f32 to vector<256x256xf32>
    %11 = arith.maximumf %9, %10 : vector<256x256xf32>
    %cst_7 = arith.constant dense<0.000000e+00> : vector<1x256xf32>
    %12 = tpu.matmul %5, %11, %cst_7 {dimension_numbers = #tpu.dot_dimension_numbers<[1], [1], [0], [0], [0, 0, 1, 0], [], []>} : vector<1x256xf32>, vector<256x256xf32>, vector<1x256xf32> -> vector<1x256xf32>
    %c1 = arith.constant 1 : index
    %c0_8 = arith.constant 0 : index
    %c0_9 = arith.constant 0 : index
    %13 = vector.load %arg3[%c1, %c0_8, %c0_9] : memref<2x4x256xf32, #tpu.memory_space<vmem>>, vector<1x4x256xf32>
    %14 = vector.shape_cast %13 : vector<1x4x256xf32> to vector<4x256xf32>
    %15 = arith.truncf %14 : vector<4x256xf32> to vector<4x256xbf16>
    %cst_10 = arith.constant dense<0.000000e+00> : vector<256x256xf32>
    %16 = tpu.matmul %4, %15, %cst_10 {dimension_numbers = #tpu.dot_dimension_numbers<[1], [0], [0], [1], [0, 0, 1, 1], [], []>} : vector<256x4xbf16>, vector<4x256xbf16>, vector<256x256xf32> -> vector<256x256xf32>
    %cst_11 = arith.constant 0.000000e+00 : f32
    %17 = vector.broadcast %cst_11 : f32 to vector<256x256xf32>
    %18 = arith.maximumf %16, %17 : vector<256x256xf32>
    %cst_12 = arith.constant dense<0.000000e+00> : vector<1x256xf32>
    %19 = tpu.matmul %5, %18, %cst_12 {dimension_numbers = #tpu.dot_dimension_numbers<[1], [1], [0], [0], [0, 0, 1, 0], [], []>} : vector<1x256xf32>, vector<256x256xf32>, vector<1x256xf32> -> vector<1x256xf32>
    %c0_13 = arith.constant 0 : index
    %c0_14 = arith.constant 0 : index
    %20 = vector.load %arg8[%c0_13, %c0_14] : memref<2x256xf32, #tpu.memory_space<vmem>>, vector<2x256xf32>
    %21 = tpu.concatenate %12, %19 in 0 : vector<1x256xf32>, vector<1x256xf32> -> vector<2x256xf32>
    %22 = arith.addf %20, %21 : vector<2x256xf32>
    %c0_15 = arith.constant 0 : index
    %c0_16 = arith.constant 0 : index
    %23 = vector.load %arg8[%c0_15, %c0_16] : memref<2x256xf32, #tpu.memory_space<vmem>>, vector<2x256xf32>
    tpu.vector_store %arg8[%c0_15, %c0_16], %22 {strides = array<i32>} : memref<2x256xf32, #tpu.memory_space<vmem>>, vector<2x256xf32>,
    %c0_i32_17 = arith.constant 0 : i32
    %24 = arith.cmpi eq, %arg1, %c0_i32_17 : i32
    %25 = arith.extui %24 : i1 to i32
    %c0_i32_18 = arith.constant 0 : i32
    %26 = arith.cmpi ne, %25, %c0_i32_18 : i32
    scf.if %26 {
      %c0_19 = arith.constant 0 : index
      %c0_20 = arith.constant 0 : index
      %27 = vector.load %arg8[%c0_19, %c0_20] : memref<2x256xf32, #tpu.memory_space<vmem>>, vector<2x256xf32>
      %28 = arith.truncf %27 : vector<2x256xf32> to vector<2x256xbf16>
      %c0_21 = arith.constant 0 : index
      %c0_22 = arith.constant 0 : index
      %29 = vector.load %arg5[%c0_21, %c0_22] : memref<256x128xbf16, #tpu.memory_space<vmem>>, vector<256x128xbf16>
      %cst_23 = arith.constant dense<0.000000e+00> : vector<2x128xf32>
      %30 = tpu.matmul %28, %29, %cst_23 {dimension_numbers = #tpu.dot_dimension_numbers<[1], [0], [0], [1], [0, 0, 1, 1], [], []>} : vector<2x256xbf16>, vector<256x128xbf16>, vector<2x128xf32> -> vector<2x128xf32>
      %c0_24 = arith.constant 0 : index
      %c0_25 = arith.constant 0 : index
      %31 = vector.load %arg6[%c0_24, %c0_25] : memref<1x128xf32, #tpu.memory_space<vmem>>, vector<1x128xf32>
      %32 = vector.broadcast %31 : vector<1x128xf32> to vector<2x128xf32>
      %33 = arith.addf %30, %32 : vector<2x128xf32>
      %cst_26 = arith.constant 0.000000e+00 : f32
      %34 = vector.broadcast %cst_26 : f32 to vector<2x128xf32>
      %35 = arith.maximumf %33, %34 : vector<2x128xf32>
      %c0_27 = arith.constant 0 : index
      %36 = memref.load %arg2[%c0_27] : memref<1xi32, #tpu.memory_space<smem>>
      %37 = tpu.iota {dimensions = array<i32: 0>} : vector<2x128xi32>
      %38 = vector.broadcast %0 : i32 to vector<2x128xi32>
      %39 = arith.addi %38, %37 : vector<2x128xi32>
      %40 = tpu.iota {dimensions = array<i32: 1>} : vector<2x128xi32>
      %c-1640531535_i32 = arith.constant -1640531535 : i32
      %41 = arith.muli %36, %c-1640531535_i32 : i32
      %c-2048144777_i32 = arith.constant -2048144777 : i32
      %42 = vector.broadcast %c-2048144777_i32 : i32 to vector<2x128xi32>
      %43 = arith.muli %39, %42 : vector<2x128xi32>
      %44 = vector.broadcast %41 : i32 to vector<2x128xi32>
      %45 = arith.addi %44, %43 : vector<2x128xi32>
      %46 = arith.xori %40, %45 : vector<2x128xi32>
      %c16_i32 = arith.constant 16 : i32
      %47 = vector.broadcast %c16_i32 : i32 to vector<2x128xi32>
      %48 = arith.shrui %46, %47 : vector<2x128xi32>
      %49 = arith.xori %46, %48 : vector<2x128xi32>
      %c2146121005_i32 = arith.constant 2146121005 : i32
      %50 = vector.broadcast %c2146121005_i32 : i32 to vector<2x128xi32>
      %51 = arith.muli %49, %50 : vector<2x128xi32>
      %c15_i32 = arith.constant 15 : i32
      %52 = vector.broadcast %c15_i32 : i32 to vector<2x128xi32>
      %53 = arith.shrui %51, %52 : vector<2x128xi32>
      %54 = arith.xori %51, %53 : vector<2x128xi32>
      %c-2073254261_i32 = arith.constant -2073254261 : i32
      %55 = vector.broadcast %c-2073254261_i32 : i32 to vector<2x128xi32>
      %56 = arith.muli %54, %55 : vector<2x128xi32>
      %c16_i32_28 = arith.constant 16 : i32
      %57 = vector.broadcast %c16_i32_28 : i32 to vector<2x128xi32>
      %58 = arith.shrui %56, %57 : vector<2x128xi32>
      %59 = arith.xori %56, %58 : vector<2x128xi32>
      %c1_i32 = arith.constant 1 : i32
      %60 = vector.broadcast %c1_i32 : i32 to vector<2x128xi32>
      %61 = arith.andi %59, %60 : vector<2x128xi32>
      %c0_i32_29 = arith.constant 0 : i32
      %62 = vector.broadcast %c0_i32_29 : i32 to vector<2x128xi32>
      %63 = arith.cmpi eq, %61, %62 : vector<2x128xi32>
      %cst_30 = arith.constant 2.000000e+00 : f32
      %64 = vector.broadcast %cst_30 : f32 to vector<2x128xf32>
      %65 = arith.mulf %35, %64 : vector<2x128xf32>
      %cst_31 = arith.constant 0.000000e+00 : f32
      %66 = vector.broadcast %cst_31 : f32 to vector<2x128xf32>
      %67 = arith.select %63, %65, %66 : vector<2x128xi1>, vector<2x128xf32>
      %c0_32 = arith.constant 0 : index
      %c0_33 = arith.constant 0 : index
      %68 = vector.load %arg7[%c0_32, %c0_33] : memref<2x128xf32, #tpu.memory_space<vmem>>, vector<2x128xf32>
      tpu.vector_store %arg7[%c0_32, %c0_33], %67 {strides = array<i32>} : memref<2x128xf32, #tpu.memory_space<vmem>>, vector<2x128xf32>,
    } else {
    }
    return
  }
  func.func @transform_0(%arg0: i32, %arg1: i32, %arg2: memref<1xi32, #tpu.memory_space<smem>>) -> (i32, i32, i32) {
    %c0_i32 = arith.constant 0 : i32
    %c0_i32_0 = arith.constant 0 : i32
    return %arg0, %c0_i32, %arg1 : i32, i32, i32
  }
  func.func @transform_1(%arg0: i32, %arg1: i32, %arg2: memref<1xi32, #tpu.memory_space<smem>>) -> (i32, i32) {
    %c0_i32 = arith.constant 0 : i32
    %c0_i32_0 = arith.constant 0 : i32
    %c0_i32_1 = arith.constant 0 : i32
    return %c0_i32, %c0_i32_0 : i32, i32
  }
  func.func @transform_2(%arg0: i32, %arg1: i32, %arg2: memref<1xi32, #tpu.memory_space<smem>>) -> (i32, i32) {
    %c0_i32 = arith.constant 0 : i32
    %c0_i32_0 = arith.constant 0 : i32
    %c0_i32_1 = arith.constant 0 : i32
    return %c0_i32, %c0_i32_0 : i32, i32
  }
  func.func @transform_3(%arg0: i32, %arg1: i32, %arg2: memref<1xi32, #tpu.memory_space<smem>>) -> (i32, i32) {
    %c0_i32 = arith.constant 0 : i32
    %c0_i32_0 = arith.constant 0 : i32
    %c0_i32_1 = arith.constant 0 : i32
    return %c0_i32, %c0_i32_0 : i32, i32
  }
  func.func @transform_4(%arg0: i32, %arg1: i32, %arg2: memref<1xi32, #tpu.memory_space<smem>>) -> (i32, i32) {
    %c0_i32 = arith.constant 0 : i32
    %c0_i32_0 = arith.constant 0 : i32
    return %arg0, %c0_i32 : i32, i32
  }
}

</mosaic_0001>

<llo_original>
// kernel: tpu_custom_call.1
$region0: #{tpu_custom_call.1}
  #allocation0 [shape = 'u32[]', space=smem, size = 0x4, offset = 0x4, fixed_abs, tag = 'smem constant byte address 0x4 - core index']
  #allocation1 [shape = 'u32[144,128]{1,0:T(1,128)}', space=vmem, size = 0x12000, scoped, tag = 'internal scratch']
  #allocation2 [shape = 'f32[2,256]{1,0:T(2,128)}', space=vmem, size = 0x800, scoped, tag = 'scratch operand']
  #allocation3 [shape = 's32[1]{0}', space=sflag, size = 0x4, scoped, tag = 'scoped memory for tpu_custom_call.1']
  #allocation4 [shape = 's32[1]{0:T(128)S(6)}', space=smem, size = 0x200, scoped, tag = 'prefetched SMEM operand 0']
  %s0 = inlined_call_operand.<no memory space> [shape: s32[1], index: 0, kind: input, shape index: {}]
  %s1 = inlined_call_operand.hbm [shape: f32[2,4,256], index: 1, kind: input, shape index: {}]
  %s2 = inlined_call_operand.vmem [shape: bf16[256,4], index: 2, kind: input, shape index: {}]
  %s3 = inlined_call_operand.vmem [shape: bf16[256,128], index: 3, kind: input, shape index: {}]
  %s4 = inlined_call_operand.vmem [shape: f32[1,128], index: 4, kind: input, shape index: {}]
  %s5 = inlined_call_operand.hbm [shape: f32[2,128], index: 5, kind: output, shape index: {}]
  %s6 = sld [smem:[#allocation0]]
  $region38: #{tpu_custom_call.1} parent=0
    _
  %s8 = ssub.s32 1, %s6
  %s9 = scalar_select 0, %s8, %s6
  %10 = sst [smem:[#allocation4]] %s0
  $region1: #{tpu_custom_call.1} parent=0
    #allocation5 [shape = 'u8[8192]{0}', space=vmem, size = 0x2000, scoped, tag = 'input window, operand 1, single buffered']
    #allocation6 [shape = 's32[1]{0}', space=sflag, size = 0x4, scoped, tag = 'scoped memory for tpu_custom_call.1']
    #allocation7 [shape = 's32[1]{0}', space=sflag, size = 0x4, scoped, tag = 'scoped memory for tpu_custom_call.1']
    #allocation8 [shape = 'u8[1024]{0}', space=vmem, size = 0x400, scoped, tag = 'output window, operand 0, single buffered']
    %11 = vsyncpa [#allocation6], 0
    %12 = vsyncpa [#allocation7], 0
    // Predicated region
    $region2: #{tpu_custom_call.1} parent=1 // pred_check
      _
    $region3: #{tpu_custom_call.1} parent=1 // pred_check_branch
      %14 = sbr.rel (0) target = $region5
    $region4: #{tpu_custom_call.1} parent=1 // pred_region
      %s16 = ssub.s32 256, 256
      %17 = vsyncadd [#allocation6], %s16
      %s18 = sshll.u32 [#allocation5], 4
      %s19 = int_to_ptr.vmem [resolvable:$true] %s18
      %24 = dma.hbm_to_vmem [thread:$0]  %s1, 256, %s19, [#allocation6], 128, 128, 8
    $region5: #{tpu_custom_call.1} parent=1 // pred_fallthru
      _
    // Predicated region
    $region6: #{tpu_custom_call.1} parent=1 // pred_check
      _
    $region7: #{tpu_custom_call.1} parent=1 // pred_check_branch
      %26 = sbr.rel (0) target = $region9
    $region8: #{tpu_custom_call.1} parent=1 // pred_region
      _
    $region9: #{tpu_custom_call.1} parent=1 // pred_fallthru
      _
    // Predicated region
    $region10: #{tpu_custom_call.1} parent=1 // pred_check
      _
    $region11: #{tpu_custom_call.1} parent=1 // pred_check_branch
      %28 = sbr.rel (0) target = $region13
    $region12: #{tpu_custom_call.1} parent=1 // pred_region
      _
    $region13: #{tpu_custom_call.1} parent=1 // pred_fallthru
      _
    // Predicated region
    $region14: #{tpu_custom_call.1} parent=1 // pred_check
      _
    $region15: #{tpu_custom_call.1} parent=1 // pred_check_branch
      %30 = sbr.rel (0) target = $region17
    $region16: #{tpu_custom_call.1} parent=1 // pred_region
      _
    $region17: #{tpu_custom_call.1} parent=1 // pred_fallthru
      _
    // Predicated region
    $region18: #{tpu_custom_call.1} parent=1 // pred_check
      _
    $region19: #{tpu_custom_call.1} parent=1 // pred_check_branch
      %32 = sbr.rel (0) target = $region21
    $region20: #{tpu_custom_call.1} parent=1 // pred_region
      %33 = dma.done [#allocation6], 256
    $region21: #{tpu_custom_call.1} parent=1 // pred_fallthru
      _
    %s35 = smul.u32 0, 2
    %p36 = scmp.eq.s32.totalorder 0, 0
    // Predicated region
    $region22: #{tpu_custom_call.1} parent=1 // pred_check
      %p37 = pneg %p36
    $region23: #{tpu_custom_call.1} parent=1 // pred_check_branch
      %39 = sbr.rel (%p37) target = $region25
    $region24: #{tpu_custom_call.1} parent=1 // pred_region
      %40 = vst [vmem:[#allocation2] sm:$0xf] 0.0
    $region25: #{tpu_custom_call.1} parent=1 // pred_fallthru
      _
    %v41 = vld [vmem:[%s2] sm:$0xf]
    %v42 = vld [vmem:[%s2 + $0x4] sm:$0xf]
    %v43 = vld [vmem:[%s2 + $0x8] sm:$0xf]
    %v44 = vld [vmem:[%s2 + $0xc] sm:$0xf]
    %v45 = vld [vmem:[%s2 + $0x10] sm:$0xf]
    %v46 = vld [vmem:[%s2 + $0x14] sm:$0xf]
    %v47 = vld [vmem:[%s2 + $0x18] sm:$0xf]
    %v48 = vld [vmem:[%s2 + $0x1c] sm:$0xf]
    %v49 = vld [vmem:[%s2 + $0x20] sm:$0xf]
    %v50 = vld [vmem:[%s2 + $0x24] sm:$0xf]
    %v51 = vld [vmem:[%s2 + $0x28] sm:$0xf]
    %v52 = vld [vmem:[%s2 + $0x2c] sm:$0xf]
    %v53 = vld [vmem:[%s2 + $0x30] sm:$0xf]
    %v54 = vld [vmem:[%s2 + $0x34] sm:$0xf]
    %v55 = vld [vmem:[%s2 + $0x38] sm:$0xf]
    %v56 = vld [vmem:[%s2 + $0x3c] sm:$0xf]
    %v57 = vld [vmem:[%s2 + $0x40] sm:$0xf]
    %v58 = vld [vmem:[%s2 + $0x44] sm:$0xf]
    %v59 = vld [vmem:[%s2 + $0x48] sm:$0xf]
    %v60 = vld [vmem:[%s2 + $0x4c] sm:$0xf]
    %v61 = vld [vmem:[%s2 + $0x50] sm:$0xf]
    %v62 = vld [vmem:[%s2 + $0x54] sm:$0xf]
    %v63 = vld [vmem:[%s2 + $0x58] sm:$0xf]
    %v64 = vld [vmem:[%s2 + $0x5c] sm:$0xf]
    %v65 = vld [vmem:[%s2 + $0x60] sm:$0xf]
    %v66 = vld [vmem:[%s2 + $0x64] sm:$0xf]
    %v67 = vld [vmem:[%s2 + $0x68] sm:$0xf]
    %v68 = vld [vmem:[%s2 + $0x6c] sm:$0xf]
    %v69 = vld [vmem:[%s2 + $0x70] sm:$0xf]
    %v70 = vld [vmem:[%s2 + $0x74] sm:$0xf]
    %v71 = vld [vmem:[%s2 + $0x78] sm:$0xf]
    %v72 = vld [vmem:[%s2 + $0x7c] sm:$0xf]
    %v73 = vld [vmem:[#allocation5] sm:$0xff]
    %v75 = vcombine.high %v73, %v73
    %v77 = vpack.c.bf16 %v73, %v73
    %v78 = vpack.c.bf16 %v75, %v75
    %v111 = vunpack.c.l.b16 %v41
    %v112 = vunpack.c.l.b16 %v42
    %v113 = vunpack.c.l.b16 %v43
    %v114 = vunpack.c.l.b16 %v44
    %v115 = vunpack.c.l.b16 %v45
    %v116 = vunpack.c.l.b16 %v46
    %v117 = vunpack.c.l.b16 %v47
    %v118 = vunpack.c.l.b16 %v48
    %v119 = vunpack.c.l.b16 %v49
    %v120 = vunpack.c.l.b16 %v50
    %v121 = vunpack.c.l.b16 %v51
    %v122 = vunpack.c.l.b16 %v52
    %v123 = vunpack.c.l.b16 %v53
    %v124 = vunpack.c.l.b16 %v54
    %v125 = vunpack.c.l.b16 %v55
    %v126 = vunpack.c.l.b16 %v56
    %v127 = vunpack.c.l.b16 %v57
    %v128 = vunpack.c.l.b16 %v58
    %v129 = vunpack.c.l.b16 %v59
    %v130 = vunpack.c.l.b16 %v60
    %v131 = vunpack.c.l.b16 %v61
    %v132 = vunpack.c.l.b16 %v62
    %v133 = vunpack.c.l.b16 %v63
    %v134 = vunpack.c.l.b16 %v64
    %v135 = vunpack.c.l.b16 %v65
    %v136 = vunpack.c.l.b16 %v66
    %v137 = vunpack.c.l.b16 %v67
    %v138 = vunpack.c.l.b16 %v68
    %v139 = vunpack.c.l.b16 %v69
    %v140 = vunpack.c.l.b16 %v70
    %v141 = vunpack.c.l.b16 %v71
    %v142 = vunpack.c.l.b16 %v72
    %v143 = vpack.c.b16 %v112, %v111
    %v144 = vpack.c.b16 %v114, %v113
    %v145 = vpack.c.b16 %v116, %v115
    %v146 = vpack.c.b16 %v118, %v117
    %v147 = vpack.c.b16 %v120, %v119
    %v148 = vpack.c.b16 %v122, %v121
    %v149 = vpack.c.b16 %v124, %v123
    %v150 = vpack.c.b16 %v126, %v125
    %v151 = vpack.c.b16 %v128, %v127
    %v152 = vpack.c.b16 %v130, %v129
    %v153 = vpack.c.b16 %v132, %v131
    %v154 = vpack.c.b16 %v134, %v133
    %v155 = vpack.c.b16 %v136, %v135
    %v156 = vpack.c.b16 %v138, %v137
    %v157 = vpack.c.b16 %v140, %v139
    %v158 = vpack.c.b16 %v142, %v141
    %vm159 = vcmask 31744
    %v161 = vsel %vm159, %v143, 0
    %v164 = vsel %vm159, %v144, 0
    %v167 = vsel %vm159, %v145, 0
    %v170 = vsel %vm159, %v146, 0
    %v173 = vsel %vm159, %v147, 0
    %v176 = vsel %vm159, %v148, 0
    %v179 = vsel %vm159, %v149, 0
    %v182 = vsel %vm159, %v150, 0
    %v185 = vsel %vm159, %v151, 0
    %v188 = vsel %vm159, %v152, 0
    %v191 = vsel %vm159, %v153, 0
    %v194 = vsel %vm159, %v154, 0
    %v197 = vsel %vm159, %v155, 0
    %v200 = vsel %vm159, %v156, 0
    %v203 = vsel %vm159, %v157, 0
    %v206 = vsel %vm159, %v158, 0
    %vm208 = vcmask 1041408
    %v210 = vsel %vm208, %v77, 0
    %v213 = vsel %vm208, %v78, 0
    %215 = vmatprep.subr.bf16.mxu0 0
    %216 = vmatpush1.bf16.msra.mxu0 0
    %217 = vmatprep.subr.bf16.mxu0 0
    %218 = vmatpush1.bf16.msra.mxu0 0
    %219 = vmatprep.subr.bf16.mxu0 0
    %220 = vmatpush1.bf16.msra.mxu0 0
    %221 = vmatprep.subr.bf16.mxu0 0
    %222 = vmatpush1.bf16.msra.mxu0 0
    %223 = vmatprep.subr.bf16.mxu0 0
    %224 = vmatpush1.bf16.msra.mxu0 0
    %225 = vmatprep.subr.bf16.mxu0 0
    %226 = vmatpush1.bf16.msra.mxu0 0
    %227 = vmatprep.subr.bf16.mxu0 0
    %228 = vmatpush1.bf16.msra.mxu0 0
    %229 = vmatprep.subr.bf16.mxu0 %v213
    %230 = vmatpush1.bf16.msra.mxu0 %v210
    %231 = vmatprep.subr.bf16.mxu0 0
    %232 = vmatpush2.bf16.msra.mxu0 0
    %233 = vmatprep.subr.bf16.mxu0 0
    %234 = vmatpush2.bf16.msra.mxu0 0
    %235 = vmatprep.subr.bf16.mxu0 0
    %236 = vmatpush2.bf16.msra.mxu0 0
    %237 = vmatprep.subr.bf16.mxu0 0
    %238 = vmatpush2.bf16.msra.mxu0 0
    %239 = vmatprep.subr.bf16.mxu0 0
    %240 = vmatpush2.bf16.msra.mxu0 0
    %241 = vmatprep.subr.bf16.mxu0 0
    %242 = vmatpush2.bf16.msra.mxu0 0
    %243 = vmatprep.subr.bf16.mxu0 0
    %244 = vmatpush2.bf16.msra.mxu0 0
    %245 = vmatprep.subr.bf16.mxu0 0
    %246 = vmatpush2.bf16.msra.mxu0 0
    %247 = vmatprep.mubr.bf16.mxu0 0
    %248 = vmatmul.mubr.bf16.gmra.mxu0 %v161
    %v249 = vpop.f32.mrf.mxu0
    %v250 = vadd.f32 0.0, %v249
    %v251 = vpop.f32.mrf.mxu0
    %v252 = vadd.f32 0.0, %v251
    %v253 = vpop.f32.mrf.mxu0
    %v254 = vadd.f32 0.0, %v253
    %v255 = vpop.f32.mrf.mxu0
    %v256 = vadd.f32 0.0, %v255
    %257 = vmatprep.mubr.bf16.mxu0 0
    %258 = vmatmul.mubr.bf16.gmra.mxu0 %v164
    %v259 = vpop.f32.mrf.mxu0
    %v260 = vadd.f32 0.0, %v259
    %v261 = vpop.f32.mrf.mxu0
    %v262 = vadd.f32 0.0, %v261
    %v263 = vpop.f32.mrf.mxu0
    %v264 = vadd.f32 0.0, %v263
    %v265 = vpop.f32.mrf.mxu0
    %v266 = vadd.f32 0.0, %v265
    %267 = vmatprep.mubr.bf16.mxu0 0
    %268 = vmatmul.mubr.bf16.gmra.mxu0 %v167
    %v269 = vpop.f32.mrf.mxu0
    %v270 = vadd.f32 0.0, %v269
    %v271 = vpop.f32.mrf.mxu0
    %v272 = vadd.f32 0.0, %v271
    %v273 = vpop.f32.mrf.mxu0
    %v274 = vadd.f32 0.0, %v273
    %v275 = vpop.f32.mrf.mxu0
    %v276 = vadd.f32 0.0, %v275
    %277 = vmatprep.mubr.bf16.mxu0 0
    %278 = vmatmul.mubr.bf16.gmra.mxu0 %v170
    %v279 = vpop.f32.mrf.mxu0
    %v280 = vadd.f32 0.0, %v279
    %v281 = vpop.f32.mrf.mxu0
    %v282 = vadd.f32 0.0, %v281
    %v283 = vpop.f32.mrf.mxu0
    %v284 = vadd.f32 0.0, %v283
    %v285 = vpop.f32.mrf.mxu0
    %v286 = vadd.f32 0.0, %v285
    %287 = vmatprep.mubr.bf16.mxu0 0
    %288 = vmatmul.mubr.bf16.gmra.mxu0 %v173
    %v289 = vpop.f32.mrf.mxu0
    %v290 = vadd.f32 0.0, %v289
    %v291 = vpop.f32.mrf.mxu0
    %v292 = vadd.f32 0.0, %v291
    %v293 = vpop.f32.mrf.mxu0
    %v294 = vadd.f32 0.0, %v293
    %v295 = vpop.f32.mrf.mxu0
    %v296 = vadd.f32 0.0, %v295
    %297 = vmatprep.mubr.bf16.mxu0 0
    %298 = vmatmul.mubr.bf16.gmra.mxu0 %v176
    %v299 = vpop.f32.mrf.mxu0
    %v300 = vadd.f32 0.0, %v299
    %v301 = vpop.f32.mrf.mxu0
    %v302 = vadd.f32 0.0, %v301
    %v303 = vpop.f32.mrf.mxu0
    %v304 = vadd.f32 0.0, %v303
    %v305 = vpop.f32.mrf.mxu0
    %v306 = vadd.f32 0.0, %v305
    %307 = vmatprep.mubr.bf16.mxu0 0
    %308 = vmatmul.mubr.bf16.gmra.mxu0 %v179
    %v309 = vpop.f32.mrf.mxu0
    %v310 = vadd.f32 0.0, %v309
    %v311 = vpop.f32.mrf.mxu0
    %v312 = vadd.f32 0.0, %v311
    %v313 = vpop.f32.mrf.mxu0
    %v314 = vadd.f32 0.0, %v313
    %v315 = vpop.f32.mrf.mxu0
    %v316 = vadd.f32 0.0, %v315
    %317 = vmatprep.mubr.bf16.mxu0 0
    %318 = vmatmul.mubr.bf16.gmra.mxu0 %v182
    %v319 = vpop.f32.mrf.mxu0
    %v320 = vadd.f32 0.0, %v319
    %v321 = vpop.f32.mrf.mxu0
    %v322 = vadd.f32 0.0, %v321
    %v323 = vpop.f32.mrf.mxu0
    %v324 = vadd.f32 0.0, %v323
    %v325 = vpop.f32.mrf.mxu0
    %v326 = vadd.f32 0.0, %v325
    %327 = vmatprep.mubr.bf16.mxu0 0
    %328 = vmatmul.mubr.bf16.gmra.mxu0 %v185
    %v329 = vpop.f32.mrf.mxu0
    %v330 = vadd.f32 0.0, %v329
    %v331 = vpop.f32.mrf.mxu0
    %v332 = vadd.f32 0.0, %v331
    %v333 = vpop.f32.mrf.mxu0
    %v334 = vadd.f32 0.0, %v333
    %v335 = vpop.f32.mrf.mxu0
    %v336 = vadd.f32 0.0, %v335
    %337 = vmatprep.mubr.bf16.mxu0 0
    %338 = vmatmul.mubr.bf16.gmra.mxu0 %v188
    %v339 = vpop.f32.mrf.mxu0
    %v340 = vadd.f32 0.0, %v339
    %v341 = vpop.f32.mrf.mxu0
    %v342 = vadd.f32 0.0, %v341
    %v343 = vpop.f32.mrf.mxu0
    %v344 = vadd.f32 0.0, %v343
    %v345 = vpop.f32.mrf.mxu0
    %v346 = vadd.f32 0.0, %v345
    %347 = vmatprep.mubr.bf16.mxu0 0
    %348 = vmatmul.mubr.bf16.gmra.mxu0 %v191
    %v349 = vpop.f32.mrf.mxu0
    %v350 = vadd.f32 0.0, %v349
    %v351 = vpop.f32.mrf.mxu0
    %v352 = vadd.f32 0.0, %v351
    %v353 = vpop.f32.mrf.mxu0
    %v354 = vadd.f32 0.0, %v353
    %v355 = vpop.f32.mrf.mxu0
    %v356 = vadd.f32 0.0, %v355
    %357 = vmatprep.mubr.bf16.mxu0 0
    %358 = vmatmul.mubr.bf16.gmra.mxu0 %v194
    %v359 = vpop.f32.mrf.mxu0
    %v360 = vadd.f32 0.0, %v359
    %v361 = vpop.f32.mrf.mxu0
    %v362 = vadd.f32 0.0, %v361
    %v363 = vpop.f32.mrf.mxu0
    %v364 = vadd.f32 0.0, %v363
    %v365 = vpop.f32.mrf.mxu0
    %v366 = vadd.f32 0.0, %v365
    %367 = vmatprep.mubr.bf16.mxu0 0
    %368 = vmatmul.mubr.bf16.gmra.mxu0 %v197
    %v369 = vpop.f32.mrf.mxu0
    %v370 = vadd.f32 0.0, %v369
    %v371 = vpop.f32.mrf.mxu0
    %v372 = vadd.f32 0.0, %v371
    %v373 = vpop.f32.mrf.mxu0
    %v374 = vadd.f32 0.0, %v373
    %v375 = vpop.f32.mrf.mxu0
    %v376 = vadd.f32 0.0, %v375
    %377 = vmatprep.mubr.bf16.mxu0 0
    %378 = vmatmul.mubr.bf16.gmra.mxu0 %v200
    %v379 = vpop.f32.mrf.mxu0
    %v380 = vadd.f32 0.0, %v379
    %v381 = vpop.f32.mrf.mxu0
    %v382 = vadd.f32 0.0, %v381
    %v383 = vpop.f32.mrf.mxu0
    %v384 = vadd.f32 0.0, %v383
    %v385 = vpop.f32.mrf.mxu0
    %v386 = vadd.f32 0.0, %v385
    %387 = vmatprep.mubr.bf16.mxu0 0
    %388 = vmatmul.mubr.bf16.gmra.mxu0 %v203
    %v389 = vpop.f32.mrf.mxu0
    %v390 = vadd.f32 0.0, %v389
    %v391 = vpop.f32.mrf.mxu0
    %v392 = vadd.f32 0.0, %v391
    %v393 = vpop.f32.mrf.mxu0
    %v394 = vadd.f32 0.0, %v393
    %v395 = vpop.f32.mrf.mxu0
    %v396 = vadd.f32 0.0, %v395
    %397 = vmatprep.mubr.bf16.mxu0 0
    %398 = vmatmul.mubr.bf16.gmra.mxu0 %v206
    %v399 = vpop.f32.mrf.mxu0
    %v400 = vadd.f32 0.0, %v399
    %v401 = vpop.f32.mrf.mxu0
    %v402 = vadd.f32 0.0, %v401
    %v403 = vpop.f32.mrf.mxu0
    %v404 = vadd.f32 0.0, %v403
    %v405 = vpop.f32.mrf.mxu0
    %v406 = vadd.f32 0.0, %v405
    %407 = vdwg.mxu0
    %v408 = vmax.f32 %v250, 0.0
    %v409 = vmax.f32 %v252, 0.0
    %v410 = vmax.f32 %v254, 0.0
    %v411 = vmax.f32 %v256, 0.0
    %v412 = vmax.f32 %v260, 0.0
    %v413 = vmax.f32 %v262, 0.0
    %v414 = vmax.f32 %v264, 0.0
    %v415 = vmax.f32 %v266, 0.0
    %v416 = vmax.f32 %v270, 0.0
    %v417 = vmax.f32 %v272, 0.0
    %v418 = vmax.f32 %v274, 0.0
    %v419 = vmax.f32 %v276, 0.0
    %v420 = vmax.f32 %v280, 0.0
    %v421 = vmax.f32 %v282, 0.0
    %v422 = vmax.f32 %v284, 0.0
    %v423 = vmax.f32 %v286, 0.0
    %v424 = vmax.f32 %v290, 0.0
    %v425 = vmax.f32 %v292, 0.0
    %v426 = vmax.f32 %v294, 0.0
    %v427 = vmax.f32 %v296, 0.0
    %v428 = vmax.f32 %v300, 0.0
    %v429 = vmax.f32 %v302, 0.0
    %v430 = vmax.f32 %v304, 0.0
    %v431 = vmax.f32 %v306, 0.0
    %v432 = vmax.f32 %v310, 0.0
    %v433 = vmax.f32 %v312, 0.0
    %v434 = vmax.f32 %v314, 0.0
    %v435 = vmax.f32 %v316, 0.0
    %v436 = vmax.f32 %v320, 0.0
    %v437 = vmax.f32 %v322, 0.0
    %v438 = vmax.f32 %v324, 0.0
    %v439 = vmax.f32 %v326, 0.0
    %v440 = vmax.f32 %v330, 0.0
    %v441 = vmax.f32 %v332, 0.0
    %v442 = vmax.f32 %v334, 0.0
    %v443 = vmax.f32 %v336, 0.0
    %v444 = vmax.f32 %v340, 0.0
    %v445 = vmax.f32 %v342, 0.0
    %v446 = vmax.f32 %v344, 0.0
    %v447 = vmax.f32 %v346, 0.0
    %v448 = vmax.f32 %v350, 0.0
    %v449 = vmax.f32 %v352, 0.0
    %v450 = vmax.f32 %v354, 0.0
    %v451 = vmax.f32 %v356, 0.0
    %v452 = vmax.f32 %v360, 0.0
    %v453 = vmax.f32 %v362, 0.0
    %v454 = vmax.f32 %v364, 0.0
    %v455 = vmax.f32 %v366, 0.0
    %v456 = vmax.f32 %v370, 0.0
    %v457 = vmax.f32 %v372, 0.0
    %v458 = vmax.f32 %v374, 0.0
    %v459 = vmax.f32 %v376, 0.0
    %v460 = vmax.f32 %v380, 0.0
    %v461 = vmax.f32 %v382, 0.0
    %v462 = vmax.f32 %v384, 0.0
    %v463 = vmax.f32 %v386, 0.0
    %v464 = vmax.f32 %v390, 0.0
    %v465 = vmax.f32 %v392, 0.0
    %v466 = vmax.f32 %v394, 0.0
    %v467 = vmax.f32 %v396, 0.0
    %v468 = vmax.f32 %v400, 0.0
    %v469 = vmax.f32 %v402, 0.0
    %v470 = vmax.f32 %v404, 0.0
    %v471 = vmax.f32 %v406, 0.0
    %472 = vmatprep.subr.mxu0 %v439
    %473 = vmatpush1.xpose.msra.mxu0 %v438
    %474 = vmatprep.subr.mxu0 %v437
    %475 = vmatpush1.xpose.msra.mxu0 %v436
    %476 = vmatprep.subr.mxu0 %v435
    %477 = vmatpush1.xpose.msra.mxu0 %v434
    %478 = vmatprep.subr.mxu0 %v433
    %479 = vmatpush1.xpose.msra.mxu0 %v432
    %480 = vmatprep.subr.mxu0 %v431
    %481 = vmatpush1.xpose.msra.mxu0 %v430
    %482 = vmatprep.subr.mxu0 %v429
    %483 = vmatpush1.xpose.msra.mxu0 %v428
    %484 = vmatprep.subr.mxu0 %v427
    %485 = vmatpush1.xpose.msra.mxu0 %v426
    %486 = vmatprep.subr.mxu0 %v425
    %487 = vmatpush1.xpose.msra.mxu0 %v424
    %488 = vmatprep.subr.mxu0 %v423
    %489 = vmatpush1.xpose.msra.mxu0 %v422
    %490 = vmatprep.subr.mxu0 %v421
    %491 = vmatpush1.xpose.msra.mxu0 %v420
    %492 = vmatprep.subr.mxu0 %v419
    %493 = vmatpush1.xpose.msra.mxu0 %v418
    %494 = vmatprep.subr.mxu0 %v417
    %495 = vmatpush1.xpose.msra.mxu0 %v416
    %496 = vmatprep.subr.mxu0 %v415
    %497 = vmatpush1.xpose.msra.mxu0 %v414
    %498 = vmatprep.subr.mxu0 %v413
    %499 = vmatpush1.xpose.msra.mxu0 %v412
    %500 = vmatprep.subr.mxu0 %v411
    %501 = vmatpush1.xpose.msra.mxu0 %v410
    %502 = vmatprep.subr.mxu0 %v409
    %503 = vmatpush1.xpose.msra.mxu0 %v408
    %504 = vmatprep.subr.mxu0 %v471
    %505 = vmatpush2.xpose.msra.mxu0 %v470
    %506 = vmatprep.subr.mxu0 %v469
    %507 = vmatpush2.xpose.msra.mxu0 %v468
    %508 = vmatprep.subr.mxu0 %v467
    %509 = vmatpush2.xpose.msra.mxu0 %v466
    %510 = vmatprep.subr.mxu0 %v465
    %511 = vmatpush2.xpose.msra.mxu0 %v464
    %512 = vmatprep.subr.mxu0 %v463
    %513 = vmatpush2.xpose.msra.mxu0 %v462
    %514 = vmatprep.subr.mxu0 %v461
    %515 = vmatpush2.xpose.msra.mxu0 %v460
    %516 = vmatprep.subr.mxu0 %v459
    %517 = vmatpush2.xpose.msra.mxu0 %v458
    %518 = vmatprep.subr.mxu0 %v457
    %519 = vmatpush2.xpose.msra.mxu0 %v456
    %520 = vmatprep.subr.mxu0 %v455
    %521 = vmatpush2.xpose.msra.mxu0 %v454
    %522 = vmatprep.subr.mxu0 %v453
    %523 = vmatpush2.xpose.msra.mxu0 %v452
    %524 = vmatprep.subr.mxu0 %v451
    %525 = vmatpush2.xpose.msra.mxu0 %v450
    %526 = vmatprep.subr.mxu0 %v449
    %527 = vmatpush2.xpose.msra.mxu0 %v448
    %528 = vmatprep.subr.mxu0 %v447
    %529 = vmatpush2.xpose.msra.mxu0 %v446
    %530 = vmatprep.subr.mxu0 %v445
    %531 = vmatpush2.xpose.msra.mxu0 %v444
    %532 = vmatprep.subr.mxu0 %v443
    %533 = vmatpush2.xpose.msra.mxu0 %v442
    %534 = vmatprep.subr.mxu0 %v441
    %535 = vmatpush2.xpose.msra.mxu0 %v440
    %536 = vmatprep.mubr.f32.mxu0 1.0
    %537 = vmatmul.mubr.f32.gmra.mxu0 1.0
    %v538 = vpop.f32.mrf.mxu0
    %v539 = vadd.f32 0.0, %v538
    %v540 = vpop.f32.mrf.mxu0
    %v541 = vadd.f32 0.0, %v540
    %542 = vdwg.mxu0
    %s543 = scalar_lea.vmem [#allocation5], 8
    %v544 = vld [vmem:[%s543] sm:$0xff]
    %v546 = vcombine.high %v544, %v544
    %v548 = vpack.c.bf16 %v544, %v544
    %v549 = vpack.c.bf16 %v546, %v546
    %v551 = vsel %vm208, %v548, 0
    %v554 = vsel %vm208, %v549, 0
    %556 = vmatprep.subr.bf16.mxu0 0
    %557 = vmatpush1.bf16.msra.mxu0 0
    %558 = vmatprep.subr.bf16.mxu0 0
    %559 = vmatpush1.bf16.msra.mxu0 0
    %560 = vmatprep.subr.bf16.mxu0 0
    %561 = vmatpush1.bf16.msra.mxu0 0
    %562 = vmatprep.subr.bf16.mxu0 0
    %563 = vmatpush1.bf16.msra.mxu0 0
    %564 = vmatprep.subr.bf16.mxu0 0
    %565 = vmatpush1.bf16.msra.mxu0 0
    %566 = vmatprep.subr.bf16.mxu0 0
    %567 = vmatpush1.bf16.msra.mxu0 0
    %568 = vmatprep.subr.bf16.mxu0 0
    %569 = vmatpush1.bf16.msra.mxu0 0
    %570 = vmatprep.subr.bf16.mxu0 %v554
    %571 = vmatpush1.bf16.msra.mxu0 %v551
    %572 = vmatprep.subr.bf16.mxu0 0
    %573 = vmatpush2.bf16.msra.mxu0 0
    %574 = vmatprep.subr.bf16.mxu0 0
    %575 = vmatpush2.bf16.msra.mxu0 0
    %576 = vmatprep.subr.bf16.mxu0 0
    %577 = vmatpush2.bf16.msra.mxu0 0
    %578 = vmatprep.subr.bf16.mxu0 0
    %579 = vmatpush2.bf16.msra.mxu0 0
    %580 = vmatprep.subr.bf16.mxu0 0
    %581 = vmatpush2.bf16.msra.mxu0 0
    %582 = vmatprep.subr.bf16.mxu0 0
    %583 = vmatpush2.bf16.msra.mxu0 0
    %584 = vmatprep.subr.bf16.mxu0 0
    %585 = vmatpush2.bf16.msra.mxu0 0
    %586 = vmatprep.subr.bf16.mxu0 0
    %587 = vmatpush2.bf16.msra.mxu0 0
    %588 = vmatprep.mubr.bf16.mxu0 0
    %589 = vmatmul.mubr.bf16.gmra.mxu0 %v161
    %v590 = vpop.f32.mrf.mxu0
    %v591 = vadd.f32 0.0, %v590
    %v592 = vpop.f32.mrf.mxu0
    %v593 = vadd.f32 0.0, %v592
    %v594 = vpop.f32.mrf.mxu0
    %v595 = vadd.f32 0.0, %v594
    %v596 = vpop.f32.mrf.mxu0
    %v597 = vadd.f32 0.0, %v596
    %598 = vmatprep.mubr.bf16.mxu0 0
    %599 = vmatmul.mubr.bf16.gmra.mxu0 %v164
    %v600 = vpop.f32.mrf.mxu0
    %v601 = vadd.f32 0.0, %v600
    %v602 = vpop.f32.mrf.mxu0
    %v603 = vadd.f32 0.0, %v602
    %v604 = vpop.f32.mrf.mxu0
    %v605 = vadd.f32 0.0, %v604
    %v606 = vpop.f32.mrf.mxu0
    %v607 = vadd.f32 0.0, %v606
    %608 = vmatprep.mubr.bf16.mxu0 0
    %609 = vmatmul.mubr.bf16.gmra.mxu0 %v167
    %v610 = vpop.f32.mrf.mxu0
    %v611 = vadd.f32 0.0, %v610
    %v612 = vpop.f32.mrf.mxu0
    %v613 = vadd.f32 0.0, %v612
    %v614 = vpop.f32.mrf.mxu0
    %v615 = vadd.f32 0.0, %v614
    %v616 = vpop.f32.mrf.mxu0
    %v617 = vadd.f32 0.0, %v616
    %618 = vmatprep.mubr.bf16.mxu0 0
    %619 = vmatmul.mubr.bf16.gmra.mxu0 %v170
    %v620 = vpop.f32.mrf.mxu0
    %v621 = vadd.f32 0.0, %v620
    %v622 = vpop.f32.mrf.mxu0
    %v623 = vadd.f32 0.0, %v622
    %v624 = vpop.f32.mrf.mxu0
    %v625 = vadd.f32 0.0, %v624
    %v626 = vpop.f32.mrf.mxu0
    %v627 = vadd.f32 0.0, %v626
    %628 = vmatprep.mubr.bf16.mxu0 0
    %629 = vmatmul.mubr.bf16.gmra.mxu0 %v173
    %v630 = vpop.f32.mrf.mxu0
    %v631 = vadd.f32 0.0, %v630
    %v632 = vpop.f32.mrf.mxu0
    %v633 = vadd.f32 0.0, %v632
    %v634 = vpop.f32.mrf.mxu0
    %v635 = vadd.f32 0.0, %v634
    %v636 = vpop.f32.mrf.mxu0
    %v637 = vadd.f32 0.0, %v636
    %638 = vmatprep.mubr.bf16.mxu0 0
    %639 = vmatmul.mubr.bf16.gmra.mxu0 %v176
    %v640 = vpop.f32.mrf.mxu0
    %v641 = vadd.f32 0.0, %v640
    %v642 = vpop.f32.mrf.mxu0
    %v643 = vadd.f32 0.0, %v642
    %v644 = vpop.f32.mrf.mxu0
    %v645 = vadd.f32 0.0, %v644
    %v646 = vpop.f32.mrf.mxu0
    %v647 = vadd.f32 0.0, %v646
    %648 = vmatprep.mubr.bf16.mxu0 0
    %649 = vmatmul.mubr.bf16.gmra.mxu0 %v179
    %v650 = vpop.f32.mrf.mxu0
    %v651 = vadd.f32 0.0, %v650
    %v652 = vpop.f32.mrf.mxu0
    %v653 = vadd.f32 0.0, %v652
    %v654 = vpop.f32.mrf.mxu0
    %v655 = vadd.f32 0.0, %v654
    %v656 = vpop.f32.mrf.mxu0
    %v657 = vadd.f32 0.0, %v656
    %658 = vmatprep.mubr.bf16.mxu0 0
    %659 = vmatmul.mubr.bf16.gmra.mxu0 %v182
    %v660 = vpop.f32.mrf.mxu0
    %v661 = vadd.f32 0.0, %v660
    %v662 = vpop.f32.mrf.mxu0
    %v663 = vadd.f32 0.0, %v662
    %v664 = vpop.f32.mrf.mxu0
    %v665 = vadd.f32 0.0, %v664
    %v666 = vpop.f32.mrf.mxu0
    %v667 = vadd.f32 0.0, %v666
    %668 = vmatprep.mubr.bf16.mxu0 0
    %669 = vmatmul.mubr.bf16.gmra.mxu0 %v185
    %v670 = vpop.f32.mrf.mxu0
    %v671 = vadd.f32 0.0, %v670
    %v672 = vpop.f32.mrf.mxu0
    %v673 = vadd.f32 0.0, %v672
    %v674 = vpop.f32.mrf.mxu0
    %v675 = vadd.f32 0.0, %v674
    %v676 = vpop.f32.mrf.mxu0
    %v677 = vadd.f32 0.0, %v676
    %678 = vmatprep.mubr.bf16.mxu0 0
    %679 = vmatmul.mubr.bf16.gmra.mxu0 %v188
    %v680 = vpop.f32.mrf.mxu0
    %v681 = vadd.f32 0.0, %v680
    %v682 = vpop.f32.mrf.mxu0
    %v683 = vadd.f32 0.0, %v682
    %v684 = vpop.f32.mrf.mxu0
    %v685 = vadd.f32 0.0, %v684
    %v686 = vpop.f32.mrf.mxu0
    %v687 = vadd.f32 0.0, %v686
    %688 = vmatprep.mubr.bf16.mxu0 0
    %689 = vmatmul.mubr.bf16.gmra.mxu0 %v191
    %v690 = vpop.f32.mrf.mxu0
    %v691 = vadd.f32 0.0, %v690
    %v692 = vpop.f32.mrf.mxu0
    %v693 = vadd.f32 0.0, %v692
    %v694 = vpop.f32.mrf.mxu0
    %v695 = vadd.f32 0.0, %v694
    %v696 = vpop.f32.mrf.mxu0
    %v697 = vadd.f32 0.0, %v696
    %698 = vmatprep.mubr.bf16.mxu0 0
    %699 = vmatmul.mubr.bf16.gmra.mxu0 %v194
    %v700 = vpop.f32.mrf.mxu0
    %v701 = vadd.f32 0.0, %v700
    %v702 = vpop.f32.mrf.mxu0
    %v703 = vadd.f32 0.0, %v702
    %v704 = vpop.f32.mrf.mxu0
    %v705 = vadd.f32 0.0, %v704
    %v706 = vpop.f32.mrf.mxu0
    %v707 = vadd.f32 0.0, %v706
    %708 = vmatprep.mubr.bf16.mxu0 0
    %709 = vmatmul.mubr.bf16.gmra.mxu0 %v197
    %v710 = vpop.f32.mrf.mxu0
    %v711 = vadd.f32 0.0, %v710
    %v712 = vpop.f32.mrf.mxu0
    %v713 = vadd.f32 0.0, %v712
    %v714 = vpop.f32.mrf.mxu0
    %v715 = vadd.f32 0.0, %v714
    %v716 = vpop.f32.mrf.mxu0
    %v717 = vadd.f32 0.0, %v716
    %718 = vmatprep.mubr.bf16.mxu0 0
    %719 = vmatmul.mubr.bf16.gmra.mxu0 %v200
    %v720 = vpop.f32.mrf.mxu0
    %v721 = vadd.f32 0.0, %v720
    %v722 = vpop.f32.mrf.mxu0
    %v723 = vadd.f32 0.0, %v722
    %v724 = vpop.f32.mrf.mxu0
    %v725 = vadd.f32 0.0, %v724
    %v726 = vpop.f32.mrf.mxu0
    %v727 = vadd.f32 0.0, %v726
    %728 = vmatprep.mubr.bf16.mxu0 0
    %729 = vmatmul.mubr.bf16.gmra.mxu0 %v203
    %v730 = vpop.f32.mrf.mxu0
    %v731 = vadd.f32 0.0, %v730
    %v732 = vpop.f32.mrf.mxu0
    %v733 = vadd.f32 0.0, %v732
    %v734 = vpop.f32.mrf.mxu0
    %v735 = vadd.f32 0.0, %v734
    %v736 = vpop.f32.mrf.mxu0
    %v737 = vadd.f32 0.0, %v736
    %738 = vmatprep.mubr.bf16.mxu0 0
    %739 = vmatmul.mubr.bf16.gmra.mxu0 %v206
    %v740 = vpop.f32.mrf.mxu0
    %v741 = vadd.f32 0.0, %v740
    %v742 = vpop.f32.mrf.mxu0
    %v743 = vadd.f32 0.0, %v742
    %v744 = vpop.f32.mrf.mxu0
    %v745 = vadd.f32 0.0, %v744
    %v746 = vpop.f32.mrf.mxu0
    %v747 = vadd.f32 0.0, %v746
    %748 = vdwg.mxu0
    %v749 = vmax.f32 %v591, 0.0
    %v750 = vmax.f32 %v593, 0.0
    %v751 = vmax.f32 %v595, 0.0
    %v752 = vmax.f32 %v597, 0.0
    %v753 = vmax.f32 %v601, 0.0
    %v754 = vmax.f32 %v603, 0.0
    %v755 = vmax.f32 %v605, 0.0
    %v756 = vmax.f32 %v607, 0.0
    %v757 = vmax.f32 %v611, 0.0
    %v758 = vmax.f32 %v613, 0.0
    %v759 = vmax.f32 %v615, 0.0
    %v760 = vmax.f32 %v617, 0.0
    %v761 = vmax.f32 %v621, 0.0
    %v762 = vmax.f32 %v623, 0.0
    %v763 = vmax.f32 %v625, 0.0
    %v764 = vmax.f32 %v627, 0.0
    %v765 = vmax.f32 %v631, 0.0
    %v766 = vmax.f32 %v633, 0.0
    %v767 = vmax.f32 %v635, 0.0
    %v768 = vmax.f32 %v637, 0.0
    %v769 = vmax.f32 %v641, 0.0
    %v770 = vmax.f32 %v643, 0.0
    %v771 = vmax.f32 %v645, 0.0
    %v772 = vmax.f32 %v647, 0.0
    %v773 = vmax.f32 %v651, 0.0
    %v774 = vmax.f32 %v653, 0.0
    %v775 = vmax.f32 %v655, 0.0
    %v776 = vmax.f32 %v657, 0.0
    %v777 = vmax.f32 %v661, 0.0
    %v778 = vmax.f32 %v663, 0.0
    %v779 = vmax.f32 %v665, 0.0
    %v780 = vmax.f32 %v667, 0.0
    %v781 = vmax.f32 %v671, 0.0
    %v782 = vmax.f32 %v673, 0.0
    %v783 = vmax.f32 %v675, 0.0
    %v784 = vmax.f32 %v677, 0.0
    %v785 = vmax.f32 %v681, 0.0
    %v786 = vmax.f32 %v683, 0.0
    %v787 = vmax.f32 %v685, 0.0
    %v788 = vmax.f32 %v687, 0.0
    %v789 = vmax.f32 %v691, 0.0
    %v790 = vmax.f32 %v693, 0.0
    %v791 = vmax.f32 %v695, 0.0
    %v792 = vmax.f32 %v697, 0.0
    %v793 = vmax.f32 %v701, 0.0
    %v794 = vmax.f32 %v703, 0.0
    %v795 = vmax.f32 %v705, 0.0
    %v796 = vmax.f32 %v707, 0.0
    %v797 = vmax.f32 %v711, 0.0
    %v798 = vmax.f32 %v713, 0.0
    %v799 = vmax.f32 %v715, 0.0
    %v800 = vmax.f32 %v717, 0.0
    %v801 = vmax.f32 %v721, 0.0
    %v802 = vmax.f32 %v723, 0.0
    %v803 = vmax.f32 %v725, 0.0
    %v804 = vmax.f32 %v727, 0.0
    %v805 = vmax.f32 %v731, 0.0
    %v806 = vmax.f32 %v733, 0.0
    %v807 = vmax.f32 %v735, 0.0
    %v808 = vmax.f32 %v737, 0.0
    %v809 = vmax.f32 %v741, 0.0
    %v810 = vmax.f32 %v743, 0.0
    %v811 = vmax.f32 %v745, 0.0
    %v812 = vmax.f32 %v747, 0.0
    %813 = vmatprep.subr.mxu0 %v780
    %814 = vmatpush1.xpose.msra.mxu0 %v779
    %815 = vmatprep.subr.mxu0 %v778
    %816 = vmatpush1.xpose.msra.mxu0 %v777
    %817 = vmatprep.subr.mxu0 %v776
    %818 = vmatpush1.xpose.msra.mxu0 %v775
    %819 = vmatprep.subr.mxu0 %v774
    %820 = vmatpush1.xpose.msra.mxu0 %v773
    %821 = vmatprep.subr.mxu0 %v772
    %822 = vmatpush1.xpose.msra.mxu0 %v771
    %823 = vmatprep.subr.mxu0 %v770
    %824 = vmatpush1.xpose.msra.mxu0 %v769
    %825 = vmatprep.subr.mxu0 %v768
    %826 = vmatpush1.xpose.msra.mxu0 %v767
    %827 = vmatprep.subr.mxu0 %v766
    %828 = vmatpush1.xpose.msra.mxu0 %v765
    %829 = vmatprep.subr.mxu0 %v764
    %830 = vmatpush1.xpose.msra.mxu0 %v763
    %831 = vmatprep.subr.mxu0 %v762
    %832 = vmatpush1.xpose.msra.mxu0 %v761
    %833 = vmatprep.subr.mxu0 %v760
    %834 = vmatpush1.xpose.msra.mxu0 %v759
    %835 = vmatprep.subr.mxu0 %v758
    %836 = vmatpush1.xpose.msra.mxu0 %v757
    %837 = vmatprep.subr.mxu0 %v756
    %838 = vmatpush1.xpose.msra.mxu0 %v755
    %839 = vmatprep.subr.mxu0 %v754
    %840 = vmatpush1.xpose.msra.mxu0 %v753
    %841 = vmatprep.subr.mxu0 %v752
    %842 = vmatpush1.xpose.msra.mxu0 %v751
    %843 = vmatprep.subr.mxu0 %v750
    %844 = vmatpush1.xpose.msra.mxu0 %v749
    %845 = vmatprep.subr.mxu0 %v812
    %846 = vmatpush2.xpose.msra.mxu0 %v811
    %847 = vmatprep.subr.mxu0 %v810
    %848 = vmatpush2.xpose.msra.mxu0 %v809
    %849 = vmatprep.subr.mxu0 %v808
    %850 = vmatpush2.xpose.msra.mxu0 %v807
    %851 = vmatprep.subr.mxu0 %v806
    %852 = vmatpush2.xpose.msra.mxu0 %v805
    %853 = vmatprep.subr.mxu0 %v804
    %854 = vmatpush2.xpose.msra.mxu0 %v803
    %855 = vmatprep.subr.mxu0 %v802
    %856 = vmatpush2.xpose.msra.mxu0 %v801
    %857 = vmatprep.subr.mxu0 %v800
    %858 = vmatpush2.xpose.msra.mxu0 %v799
    %859 = vmatprep.subr.mxu0 %v798
    %860 = vmatpush2.xpose.msra.mxu0 %v797
    %861 = vmatprep.subr.mxu0 %v796
    %862 = vmatpush2.xpose.msra.mxu0 %v795
    %863 = vmatprep.subr.mxu0 %v794
    %864 = vmatpush2.xpose.msra.mxu0 %v793
    %865 = vmatprep.subr.mxu0 %v792
    %866 = vmatpush2.xpose.msra.mxu0 %v791
    %867 = vmatprep.subr.mxu0 %v790
    %868 = vmatpush2.xpose.msra.mxu0 %v789
    %869 = vmatprep.subr.mxu0 %v788
    %870 = vmatpush2.xpose.msra.mxu0 %v787
    %871 = vmatprep.subr.mxu0 %v786
    %872 = vmatpush2.xpose.msra.mxu0 %v785
    %873 = vmatprep.subr.mxu0 %v784
    %874 = vmatpush2.xpose.msra.mxu0 %v783
    %875 = vmatprep.subr.mxu0 %v782
    %876 = vmatpush2.xpose.msra.mxu0 %v781
    %877 = vmatprep.mubr.f32.mxu0 1.0
    %878 = vmatmul.mubr.f32.gmra.mxu0 1.0
    %v879 = vpop.f32.mrf.mxu0
    %v880 = vadd.f32 0.0, %v879
    %v881 = vpop.f32.mrf.mxu0
    %v882 = vadd.f32 0.0, %v881
    %883 = vdwg.mxu0
    %v884 = vld [vmem:[#allocation2] sm:$0xf]
    %v887 = vrot.slane %v880, 7
    %v888 = vrot.slane %v882, 7
    %vm891 = vcmask 1040384
    %v892 = vsel %vm891, %v539, %v887
    %v893 = vsel %vm891, %v541, %v888
    %v896 = vcombine.low %v892, %v893
    %v898 = vunpack.c.l.s4 1983009808
    %v899 = vunpack.c.0.s8 %v898
    %v900 = vlaneseq
    %v901 = vshrl.u32 %v900, 7
    %v902 = vsub.s32 %v899, %v901
    %v903 = vrot.slane %v896, %v902
    %v905 = vadd.f32 %v884, %v903
    %906 = vst [vmem:[#allocation2] sm:$0xf] %v905
    // Predicated region
    $region26: #{tpu_custom_call.1} parent=1 // pred_check
      %p907 = pneg %p36
    $region27: #{tpu_custom_call.1} parent=1 // pred_check_branch
      %909 = sbr.rel (%p907) target = $region29
    $region28: #{tpu_custom_call.1} parent=1 // pred_region
      %v910 = vld [vmem:[#allocation2] sm:$0xf]
      %v913 = vunpack.c.l.s4 1983009808
      %v914 = vunpack.c.0.s8 %v913
      %v915 = vlaneseq
      %v916 = vshrl.u32 %v915, 7
      %v917 = vsub.s32 %v914, %v916
      %v918 = vrot.slane %v910, %v917
      %v919 = vcombine.high %v918, %v918
      %v922 = vpack.c.bf16 %v918, %v918
      %v923 = vpack.c.bf16 %v919, %v919
      %v924 = vld [vmem:[%s3] sm:$0xf]
      %v925 = vld [vmem:[%s3 + $0x4] sm:$0xf]
      %v926 = vld [vmem:[%s3 + $0x8] sm:$0xf]
      %v927 = vld [vmem:[%s3 + $0xc] sm:$0xf]
      %v928 = vld [vmem:[%s3 + $0x10] sm:$0xf]
      %v929 = vld [vmem:[%s3 + $0x14] sm:$0xf]
      %v930 = vld [vmem:[%s3 + $0x18] sm:$0xf]
      %v931 = vld [vmem:[%s3 + $0x1c] sm:$0xf]
      %v932 = vld [vmem:[%s3 + $0x20] sm:$0xf]
      %v933 = vld [vmem:[%s3 + $0x24] sm:$0xf]
      %v934 = vld [vmem:[%s3 + $0x28] sm:$0xf]
      %v935 = vld [vmem:[%s3 + $0x2c] sm:$0xf]
      %v936 = vld [vmem:[%s3 + $0x30] sm:$0xf]
      %v937 = vld [vmem:[%s3 + $0x34] sm:$0xf]
      %v938 = vld [vmem:[%s3 + $0x38] sm:$0xf]
      %v939 = vld [vmem:[%s3 + $0x3c] sm:$0xf]
      %v940 = vld [vmem:[%s3 + $0x40] sm:$0xf]
      %v941 = vld [vmem:[%s3 + $0x44] sm:$0xf]
      %v942 = vld [vmem:[%s3 + $0x48] sm:$0xf]
      %v943 = vld [vmem:[%s3 + $0x4c] sm:$0xf]
      %v944 = vld [vmem:[%s3 + $0x50] sm:$0xf]
      %v945 = vld [vmem:[%s3 + $0x54] sm:$0xf]
      %v946 = vld [vmem:[%s3 + $0x58] sm:$0xf]
      %v947 = vld [vmem:[%s3 + $0x5c] sm:$0xf]
      %v948 = vld [vmem:[%s3 + $0x60] sm:$0xf]
      %v949 = vld [vmem:[%s3 + $0x64] sm:$0xf]
      %v950 = vld [vmem:[%s3 + $0x68] sm:$0xf]
      %v951 = vld [vmem:[%s3 + $0x6c] sm:$0xf]
      %v952 = vld [vmem:[%s3 + $0x70] sm:$0xf]
      %v953 = vld [vmem:[%s3 + $0x74] sm:$0xf]
      %v954 = vld [vmem:[%s3 + $0x78] sm:$0xf]
      %v955 = vld [vmem:[%s3 + $0x7c] sm:$0xf]
      %v956 = vld [vmem:[%s4] sm:$0x1]
      %v958 = vlaneseq
      %v959 = vshrl.u32 %v958, 7
      %v960 = vsub.s32 0, %v959
      %v961 = vrot.slane %v956, %v960
      %v995 = vunpack.c.l.b16 %v924
      %v996 = vunpack.c.l.b16 %v925
      %v997 = vunpack.c.l.b16 %v926
      %v998 = vunpack.c.l.b16 %v927
      %v999 = vunpack.c.l.b16 %v928
      %v1000 = vunpack.c.l.b16 %v929
      %v1001 = vunpack.c.l.b16 %v930
      %v1002 = vunpack.c.l.b16 %v931
      %v1003 = vunpack.c.l.b16 %v932
      %v1004 = vunpack.c.l.b16 %v933
      %v1005 = vunpack.c.l.b16 %v934
      %v1006 = vunpack.c.l.b16 %v935
      %v1007 = vunpack.c.l.b16 %v936
      %v1008 = vunpack.c.l.b16 %v937
      %v1009 = vunpack.c.l.b16 %v938
      %v1010 = vunpack.c.l.b16 %v939
      %v1011 = vunpack.c.l.b16 %v940
      %v1012 = vunpack.c.l.b16 %v941
      %v1013 = vunpack.c.l.b16 %v942
      %v1014 = vunpack.c.l.b16 %v943
      %v1015 = vunpack.c.l.b16 %v944
      %v1016 = vunpack.c.l.b16 %v945
      %v1017 = vunpack.c.l.b16 %v946
      %v1018 = vunpack.c.l.b16 %v947
      %v1019 = vunpack.c.l.b16 %v948
      %v1020 = vunpack.c.l.b16 %v949
      %v1021 = vunpack.c.l.b16 %v950
      %v1022 = vunpack.c.l.b16 %v951
      %v1023 = vunpack.c.l.b16 %v952
      %v1024 = vunpack.c.l.b16 %v953
      %v1025 = vunpack.c.l.b16 %v954
      %v1026 = vunpack.c.l.b16 %v955
      %v1027 = vpack.c.b16 %v996, %v995
      %v1028 = vpack.c.b16 %v998, %v997
      %v1029 = vpack.c.b16 %v1000, %v999
      %v1030 = vpack.c.b16 %v1002, %v1001
      %v1031 = vpack.c.b16 %v1004, %v1003
      %v1032 = vpack.c.b16 %v1006, %v1005
      %v1033 = vpack.c.b16 %v1008, %v1007
      %v1034 = vpack.c.b16 %v1010, %v1009
      %v1035 = vpack.c.b16 %v1012, %v1011
      %v1036 = vpack.c.b16 %v1014, %v1013
      %v1037 = vpack.c.b16 %v1016, %v1015
      %v1038 = vpack.c.b16 %v1018, %v1017
      %v1039 = vpack.c.b16 %v1020, %v1019
      %v1040 = vpack.c.b16 %v1022, %v1021
      %v1041 = vpack.c.b16 %v1024, %v1023
      %v1042 = vpack.c.b16 %v1026, %v1025
      %1059 = vmatprep.subr.bf16.mxu0 0
      %1060 = vmatpush1.bf16.msra.mxu0 %v1034
      %1061 = vmatprep.subr.bf16.mxu0 0
      %1062 = vmatpush1.bf16.msra.mxu0 %v1033
      %1063 = vmatprep.subr.bf16.mxu0 0
      %1064 = vmatpush1.bf16.msra.mxu0 %v1032
      %1065 = vmatprep.subr.bf16.mxu0 0
      %1066 = vmatpush1.bf16.msra.mxu0 %v1031
      %1067 = vmatprep.subr.bf16.mxu0 0
      %1068 = vmatpush1.bf16.msra.mxu0 %v1030
      %1069 = vmatprep.subr.bf16.mxu0 0
      %1070 = vmatpush1.bf16.msra.mxu0 %v1029
      %1071 = vmatprep.subr.bf16.mxu0 0
      %1072 = vmatpush1.bf16.msra.mxu0 %v1028
      %1073 = vmatprep.subr.bf16.mxu0 0
      %1074 = vmatpush1.bf16.msra.mxu0 %v1027
      %1075 = vmatprep.subr.bf16.mxu0 0
      %1076 = vmatpush2.bf16.msra.mxu0 %v1042
      %1077 = vmatprep.subr.bf16.mxu0 0
      %1078 = vmatpush2.bf16.msra.mxu0 %v1041
      %1079 = vmatprep.subr.bf16.mxu0 0
      %1080 = vmatpush2.bf16.msra.mxu0 %v1040
      %1081 = vmatprep.subr.bf16.mxu0 0
      %1082 = vmatpush2.bf16.msra.mxu0 %v1039
      %1083 = vmatprep.subr.bf16.mxu0 0
      %1084 = vmatpush2.bf16.msra.mxu0 %v1038
      %1085 = vmatprep.subr.bf16.mxu0 0
      %1086 = vmatpush2.bf16.msra.mxu0 %v1037
      %1087 = vmatprep.subr.bf16.mxu0 0
      %1088 = vmatpush2.bf16.msra.mxu0 %v1036
      %1089 = vmatprep.subr.bf16.mxu0 0
      %1090 = vmatpush2.bf16.msra.mxu0 %v1035
      %1091 = vmatprep.mubr.bf16.mxu0 %v923
      %1092 = vmatmul.mubr.bf16.gmra.mxu0 %v922
      %v1093 = vpop.f32.mrf.mxu0
      %v1094 = vadd.f32 %v961, %v1093
      %v1095 = vpop.f32.mrf.mxu0
      %v1096 = vpop.f32.mrf.mxu0
      %v1097 = vpop.f32.mrf.mxu0
      %1098 = vdwg.mxu0
      %v1099 = vmax.f32 %v1094, 0.0
      %s1100 = sld [smem:[#allocation4]]
      %v1101 = vlaneseq
      %v1102 = vshrl.u32 %v1101, 7
      %v1103 = vstv %s35
      %v1104 = vadd.s32 %v1103, %v1102
      %v1105 = vlaneseq
      %v1106 = vand.u32 %v1105, 127
      %s1107 = smul.u32 %s1100, 2654435761
      %v1108 = vmul.u32 %v1104, 2246822519
      %v1109 = vstv %s1107
      %v1110 = vadd.s32 %v1109, %v1108
      %v1111 = vxor.u32 %v1106, %v1110
      %v1112 = vshrl.u32 %v1111, 16
      %v1113 = vxor.u32 %v1111, %v1112
      %v1114 = vmul.u32 %v1113, 2146121005
      %v1115 = vshrl.u32 %v1114, 15
      %v1116 = vxor.u32 %v1114, %v1115
      %v1117 = vmul.u32 %v1116, 2221713035
      %v1118 = vshrl.u32 %v1117, 16
      %v1119 = vxor.u32 %v1117, %v1118
      %v1120 = vand.u32 %v1119, 1
      %vm1121 = vcmp.eq.s32.totalorder %v1120, 0
      %v1122 = vmul.f32 %v1099, 2.0
      %v1123 = vsel %vm1121, %v1122, 0.0
      %1124 = vst [vmem:[#allocation8] sm:$0x3] %v1123
    $region29: #{tpu_custom_call.1} parent=1 // pred_fallthru
      _
    // Predicated region
    $region30: #{tpu_custom_call.1} parent=1 // pred_check
      _
    $region31: #{tpu_custom_call.1} parent=1 // pred_check_branch
      %1126 = sbr.rel (0) target = $region33
    $region32: #{tpu_custom_call.1} parent=1 // pred_region
      %s1128 = ssub.s32 32, 32
      %1129 = vsyncadd [#allocation7], %s1128
      %s1131 = sshll.u32 [#allocation8], 4
      %s1132 = int_to_ptr.vmem [resolvable:$true] %s1131
      %1134 = dma.vmem_to_hbm [thread:$0]  %s1132, 32, %s5, [#allocation7]
    $region33: #{tpu_custom_call.1} parent=1 // pred_fallthru
      _
    // Predicated region
    $region34: #{tpu_custom_call.1} parent=1 // pred_check
      _
    $region35: #{tpu_custom_call.1} parent=1 // pred_check_branch
      %1136 = sbr.rel (0) target = $region37
    $region36: #{tpu_custom_call.1} parent=1 // pred_region
      %1137 = dma.done [#allocation7], 32
    $region37: #{tpu_custom_call.1} parent=1 // pred_fallthru
      _
    %1138 = vsyncpa [#allocation6], 1
    %1139 = vsyncpa [#allocation7], 1

</llo_original>
